<compile_context>
chip_gen: v5e
topology: v5e:2x2
jax: 0.10.0
libtpu: 0.0.40
codegen_flags: <defaults>
</compile_context>

<pallas_src>
import functools

import jax
import jax.numpy as jnp
from jax.experimental import pallas as pl
from jax.experimental.pallas import tpu as pltpu


def _round_up(a, m):
    return ((a + m - 1) // m) * m


# ---------------------------------------------------------------------------
# Per-generation configuration.
# ---------------------------------------------------------------------------
def _tpu_config():
    try:
        kind = jax.devices()[0].device_kind.lower()
    except Exception:
        kind = ""
    if ("v5 lite" in kind) or ("v5e" in kind) or ("v5lite" in kind):
        cfg = dict(default_scoped=16 << 20, physical=128 << 20,
                   epilogue=jnp.float32, tm_target=512, min_steps=1)
    elif "v6" in kind:
        cfg = dict(default_scoped=32 << 20, physical=128 << 20,
                   epilogue=jnp.bfloat16, tm_target=512, min_steps=1)
    elif ("v7" in kind) or ("7x" in kind):
        cfg = dict(default_scoped=32 << 20, physical=64 << 20,
                   epilogue=jnp.bfloat16, tm_target=256, min_steps=2)
    else:  # unknown generation: be conservative
        cfg = dict(default_scoped=16 << 20, physical=64 << 20,
                   epilogue=jnp.float32, tm_target=256, min_steps=1)
    try:  # prefer the runtime-reported physical VMEM when available
        cfg["physical"] = int(pltpu.get_tpu_info().vmem_capacity_bytes)
    except Exception:
        pass
    return cfg


# ---------------------------------------------------------------------------
# One-time parameter preparation (cast + pad hoisted out of the forward path).
# ---------------------------------------------------------------------------
def prepare_params(params, *, compute_dtype=jnp.bfloat16):
    """Cast weights to bf16 and zero-pad hidden/output dims to multiples of 128.

    The contraction dim of layer 1 (input_size) stays unpadded so activations
    never need a wrapper-side pad/cast pass.  Zero padding is numerically exact
    (ReLU(0 + 0) = 0 contributes nothing downstream).
    """
    w1, b1 = params["w1"], params["b1"]
    w2, b2 = params["w2"], params["b2"]
    w3, b3 = params["w3"], params["b3"]
    D_in, H1 = w1.shape
    H2 = w2.shape[1]
    D_out = w3.shape[1]
    H1_p, H2_p, D_out_p = (_round_up(d, 128) for d in (H1, H2, D_out))

    def pad2(a, rows, cols, dtype):
        a = jnp.asarray(a, dtype)
        return jnp.pad(a, ((0, rows - a.shape[0]), (0, cols - a.shape[1])))

    prepared = {
        "w1": pad2(w1, D_in, H1_p, compute_dtype),
        "w2": pad2(w2, H1_p, H2_p, compute_dtype),
        "w3": pad2(w3, H2_p, D_out_p, compute_dtype),
        # Biases stay f32; the kernel casts them to the epilogue dtype.
        "b1": pad2(b1, 1, H1_p, jnp.float32),
        "b2": pad2(b2, 1, H2_p, jnp.float32),
        "b3": pad2(b3, 1, D_out_p, jnp.float32),
        "dims": (int(D_in), int(H1), int(H2), int(D_out)),
    }
    # Materialize now so the pad/cast cost is paid exactly once, not per call.
    for k, v in prepared.items():
        if k != "dims":
            prepared[k] = jax.block_until_ready(v)
    return prepared


# ---------------------------------------------------------------------------
# Fused 3-layer kernel (weights resident in VMEM, batch tiled over the grid).
# ---------------------------------------------------------------------------
def _fused_mlp_kernel(x_ref, w1_ref, b1_ref, w2_ref, b2_ref, w3_ref, b3_ref,
                      o_ref, *, epilogue_dtype):
    mxu = w1_ref.dtype          # bf16
    ep = epilogue_dtype         # bf16 on v6e/v7x, f32 on v5e
    # In-kernel cast of the f32 activations (rides spare VPU slots under MXU).
    x = x_ref[...].astype(mxu)
    h1 = jnp.dot(x, w1_ref[...], preferred_element_type=jnp.float32)
    a1 = jnp.maximum(h1.astype(ep) + b1_ref[...].astype(ep), 0).astype(mxu)
    h2 = jnp.dot(a1, w2_ref[...], preferred_element_type=jnp.float32)
    a2 = jnp.maximum(h2.astype(ep) + b2_ref[...].astype(ep), 0).astype(mxu)
    y = jnp.dot(a2, w3_ref[...], preferred_element_type=jnp.float32)
    # Final bias-add in f32; output block is 128-lane aligned -> unmasked vst.
    o_ref[...] = (y + b3_ref[...].astype(jnp.float32)).astype(o_ref.dtype)


def _pick_batch_tiling(B, tm_target, min_steps):
    B8 = _round_up(max(int(B), 1), 8)
    cap = max(8, (min(tm_target, B8) // 8) * 8)
    # Prefer a tile that divides the (8-aligned) batch exactly -> zero padded rows.
    tm = 8
    for cand in range(cap, 7, -8):
        if B8 % cand == 0:
            tm = cand
            break
    # If the only exact divisor is tiny but the batch is large, accept a little
    # padding with a 128-row tile (amortizes the ~0.35us/step grid overhead).
    if tm < 64 and B8 >= 256:
        tm = min(cap, 128)
    # Megacore (v7x): guarantee >=2 grid steps so ("parallel",) actually shards
    # the batch axis across both TensorCores.
    if min_steps >= 2 and B8 >= 16:
        while _round_up(B8, tm) // tm < min_steps and tm > 8:
            tm = max(8, _round_up(tm // 2, 8))
    return tm, _round_up(B8, tm)


# ---------------------------------------------------------------------------
# Fallback: per-layer K/N-tiled matmul (used when weights cannot stay resident).
# ---------------------------------------------------------------------------
def _linear_kernel(x_ref, w_ref, b_ref, o_ref, acc_ref, *, relu):
    @pl.when(pl.program_id(2) == 0)
    def _():
        acc_ref[...] = jnp.zeros_like(acc_ref)

    acc_ref[...] += jnp.dot(x_ref[...].astype(w_ref.dtype), w_ref[...],
                            preferred_element_type=jnp.float32)

    @pl.when(pl.program_id(2) == pl.num_programs(2) - 1)
    def _():
        y = acc_ref[...] + b_ref[...].astype(jnp.float32)
        if relu:
            y = jnp.maximum(y, 0.0)
        o_ref[...] = y.astype(o_ref.dtype)


def _linear_pallas(x, w, b, *, relu, out_dtype, tm, tn=256, tk=512):
    M, K = x.shape
    N = w.shape[1]
    tn = min(tn, N)
    if N % tn:
        tn = N
    tk = min(tk, K)
    if K % tk:
        tk = K
    grid = (M // tm, N // tn, K // tk)
    return pl.pallas_call(
        functools.partial(_linear_kernel, relu=relu),
        out_shape=jax.ShapeDtypeStruct((M, N), out_dtype),
        grid_spec=pltpu.PrefetchScalarGridSpec(
            num_scalar_prefetch=0,
            grid=grid,
            in_specs=[
                pl.BlockSpec((tm, tk), lambda i, j, k: (i, k)),
                pl.BlockSpec((tk, tn), lambda i, j, k: (k, j)),
                pl.BlockSpec((1, tn), lambda i, j, k: (0, j)),
            ],
            out_specs=pl.BlockSpec((tm, tn), lambda i, j, k: (i, j)),
            scratch_shapes=[pltpu.VMEM((tm, tn), jnp.float32)],
        ),
        compiler_params=pltpu.CompilerParams(
            dimension_semantics=("parallel", "parallel", "arbitrary")),
    )(x, w, b)


def _per_layer_forward(x, prepared, cfg, *, out_dtype):
    # TODO(synk): a single emit_pipeline-over-K fused kernel would avoid the
    # HBM round-trips of the intermediate activations in this fallback.
    B = x.shape[0]
    D_in, H1, H2, D_out = prepared["dims"]
    D_out_p = prepared["w3"].shape[1]
    tm = 256 if B >= 256 else max(8, _round_up(B, 8))
    B_pad = _round_up(B, tm)
    if B_pad != B:
        x = jnp.pad(x, ((0, B_pad - B), (0, 0)))
    a1 = _linear_pallas(x, prepared["w1"], prepared["b1"], relu=True,
                        out_dtype=jnp.bfloat16, tm=tm)
    a2 = _linear_pallas(a1, prepared["w2"], prepared["b2"], relu=True,
                        out_dtype=jnp.bfloat16, tm=tm)
    y = _linear_pallas(a2, prepared["w3"], prepared["b3"], relu=False,
                       out_dtype=out_dtype, tm=tm)
    if B_pad != B or D_out_p != D_out:
        y = y[:B, :D_out]
    return y


# ---------------------------------------------------------------------------
# Forward pass.
# ---------------------------------------------------------------------------
def two_layer_net_forward(x, prepared, *, out_dtype=jnp.float32, tm=None):
    """Fused forward of the 3-layer MLP.  `prepared` comes from prepare_params."""
    cfg = _tpu_config()
    w1, b1 = prepared["w1"], prepared["b1"]
    w2, b2 = prepared["w2"], prepared["b2"]
    w3, b3 = prepared["w3"], prepared["b3"]
    D_in, H1, H2, D_out = prepared["dims"]
    H1_p, H2_p, D_out_p = w1.shape[1], w2.shape[1], w3.shape[1]
    B = x.shape[0]
    assert x.shape[1] == D_in, "input feature dim mismatch"

    epilogue_dtype = cfg["epilogue"]
    out_itemsize = jnp.dtype(out_dtype).itemsize
    weight_bytes = sum(int(a.size) * a.dtype.itemsize
                       for a in (w1, b1, w2, b2, w3, b3))

    if tm is None:
        tm, B_pad = _pick_batch_tiling(B, cfg["tm_target"], cfg["min_steps"])
    else:
        tm = max(8, _round_up(int(tm), 8))
        B_pad = _round_up(B, tm)

    def fused_vmem(n_weight_bufs, tm_):
        io = 2 * tm_ * (D_in * x.dtype.itemsize + D_out_p * out_itemsize)
        interm = tm_ * (H1_p + H2_p) * 8   # f32 accumulators + bf16/f32 activations
        return n_weight_bufs * weight_bytes + io + interm

    vmem_cap = int(0.85 * cfg["physical"])

    # Shrink the batch tile if the fused footprint would not fit VMEM.
    while tm > 8 and fused_vmem(1, tm) > vmem_cap:
        tm = max(8, _round_up(tm // 2, 8))
        B_pad = _round_up(B, tm)

    # If the weight set can never be resident, stream it layer-by-layer instead.
    if fused_vmem(1, tm) > vmem_cap:
        return _per_layer_forward(x, prepared, cfg, out_dtype=out_dtype)

    if B_pad != B:
        x = jnp.pad(x, ((0, B_pad - B), (0, 0)))
    grid = (B_pad // tm,)

    flops = 2 * B_pad * (D_in * H1_p + H1_p * H2_p + H2_p * D_out_p)
    bytes_accessed = (B_pad * D_in * x.dtype.itemsize + weight_bytes
                      + B_pad * D_out_p * out_itemsize)
    cost = pl.CostEstimate(flops=flops, transcendentals=0,
                           bytes_accessed=bytes_accessed)

    const_map = lambda i: (0, 0)

    def build_in_specs(weight_mode):
        wkw = {} if weight_mode is None else {"pipeline_mode": weight_mode}
        return [
            pl.BlockSpec((tm, D_in), lambda i: (i, 0)),           # batch tile of x
            pl.BlockSpec((D_in, H1_p), const_map, **wkw),         # resident weights
            pl.BlockSpec((1, H1_p), const_map, **wkw),
            pl.BlockSpec((H1_p, H2_p), const_map, **wkw),
            pl.BlockSpec((1, H2_p), const_map, **wkw),
            pl.BlockSpec((H2_p, D_out_p), const_map, **wkw),
            pl.BlockSpec((1, D_out_p), const_map, **wkw),
        ]

    def run(weight_mode, n_weight_bufs):
        need = fused_vmem(n_weight_bufs, tm)
        cp = dict(dimension_semantics=("parallel",))
        if need > cfg["default_scoped"]:
            cp["vmem_limit_bytes"] = min(int(need * 1.2), vmem_cap)
        return pl.pallas_call(
            functools.partial(_fused_mlp_kernel, epilogue_dtype=epilogue_dtype),
            out_shape=jax.ShapeDtypeStruct((B_pad, D_out_p), out_dtype),
            grid_spec=pltpu.PrefetchScalarGridSpec(
                num_scalar_prefetch=0,
                grid=grid,
                in_specs=build_in_specs(weight_mode),
                out_specs=pl.BlockSpec((tm, D_out_p), lambda i: (i, 0)),
            ),
            compiler_params=pltpu.CompilerParams(**cp),
            cost_estimate=cost,
        )(x, w1, b1, w2, b2, w3, b3)

    try:
        # Constant-index weights never change across grid steps: single-buffer them.
        out = run(pl.Buffered(1), 1)
    except (TypeError, ValueError, NotImplementedError, pltpu.LoweringException):
        # Installed Pallas rejects explicit single-buffering; use default pipelining.
        out = run(None, 2)

    if B_pad != B or D_out_p != D_out:
        out = out[:B, :D_out]
    return out


# ---------------------------------------------------------------------------
# Torch-like init + pure-JAX reference for validation.
# ---------------------------------------------------------------------------
def init_params(key, input_size, hidden1, hidden2, output_size):
    """Mimics torch.nn.Linear defaults (U[-1/sqrt(fan_in), 1/sqrt(fan_in)]).
    Weights are stored transposed: (in_features, out_features)."""
    ks = jax.random.split(key, 6)

    def linear(kw, kb, fan_in, fan_out):
        bound = 1.0 / jnp.sqrt(float(fan_in))
        w = jax.random.uniform(kw, (fan_in, fan_out), jnp.float32, -bound, bound)
        b = jax.random.uniform(kb, (1, fan_out), jnp.float32, -bound, bound)
        return w, b

    w1, b1 = linear(ks[0], ks[1], input_size, hidden1)
    w2, b2 = linear(ks[2], ks[3], hidden1, hidden2)
    w3, b3 = linear(ks[4], ks[5], hidden2, output_size)
    return {"w1": w1, "b1": b1, "w2": w2, "b2": b2, "w3": w3, "b3": b3}


def _reference_forward(x, p, compute_dtype=jnp.bfloat16):
    def lin(a, w, b):
        return jnp.dot(a.astype(compute_dtype), w.astype(compute_dtype),
                       preferred_element_type=jnp.float32) + b

    a1 = jnp.maximum(lin(x, p["w1"], p["b1"]), 0.0)
    a2 = jnp.maximum(lin(a1, p["w2"], p["b2"]), 0.0)
    return lin(a2, p["w3"], p["b3"])


if __name__ == "__main__":
    # small shapes consistent with two_layer_net(input_size, h1, h2, output_size)
    batch, input_size, hidden1, hidden2, output_size = 8, 32, 64, 32, 16

    key = jax.random.PRNGKey(0)
    k_x, k_p = jax.random.split(key)
    x = jax.random.normal(k_x, (batch, input_size), jnp.float32)
    params = init_params(k_p, input_size, hidden1, hidden2, output_size)

    prepared = prepare_params(params)            # one-time cast + pad (cached)
    y = two_layer_net_forward(x, prepared)
    y = jax.block_until_ready(y)

    # Reference matched to the kernel's bf16-matmul / f32-accumulate arithmetic,
    # plus a loose sanity check against pure f32.
    y_ref_bf16 = _reference_forward(x, params, compute_dtype=jnp.bfloat16)
    y_ref_f32 = _reference_forward(x, params, compute_dtype=jnp.float32)

    assert y.shape == (batch, output_size)
    assert jnp.allclose(y, y_ref_bf16, atol=2e-2, rtol=5e-2), "mismatch vs bf16 reference"
    assert jnp.allclose(y, y_ref_f32, atol=1e-1, rtol=1e-1), "mismatch vs f32 reference"

    print("KERNEL_OK")
</pallas_src>

<mosaic_0001>
module attributes {stable_mosaic.version = 11 : i64} {
  func.func @_fused_mlp_kernel(%arg0: i32, %arg1: memref<8x32xf32, #tpu.memory_space<vmem>>, %arg2: memref<32x128xbf16, #tpu.memory_space<vmem>>, %arg3: memref<1x128xf32, #tpu.memory_space<vmem>>, %arg4: memref<128x128xbf16, #tpu.memory_space<vmem>>, %arg5: memref<1x128xf32, #tpu.memory_space<vmem>>, %arg6: memref<128x128xbf16, #tpu.memory_space<vmem>>, %arg7: memref<1x128xf32, #tpu.memory_space<vmem>>, %arg8: memref<8x128xf32, #tpu.memory_space<vmem>>) attributes {dimension_semantics = [#tpu.dimension_semantics<parallel>], iteration_bounds = array<i64: 1>, scalar_prefetch = 0 : i64, scratch_operands = 0 : i64, tpu.core_type = #tpu.core_type<tc>, window_params = [{transform_indices = @transform_0, window_bounds = array<i64: 8, 32>}, {pipeline_mode = #tpu.pipeline_mode<synchronous>, transform_indices = @transform_1, window_bounds = array<i64: 32, 128>}, {pipeline_mode = #tpu.pipeline_mode<synchronous>, transform_indices = @transform_2, window_bounds = array<i64: 1, 128>}, {pipeline_mode = #tpu.pipeline_mode<synchronous>, transform_indices = @transform_3, window_bounds = array<i64: 128, 128>}, {pipeline_mode = #tpu.pipeline_mode<synchronous>, transform_indices = @transform_4, window_bounds = array<i64: 1, 128>}, {pipeline_mode = #tpu.pipeline_mode<synchronous>, transform_indices = @transform_5, window_bounds = array<i64: 128, 128>}, {pipeline_mode = #tpu.pipeline_mode<synchronous>, transform_indices = @transform_6, window_bounds = array<i64: 1, 128>}, {transform_indices = @transform_7, window_bounds = array<i64: 8, 128>}]} {
    %c0 = arith.constant 0 : index
    %c0_0 = arith.constant 0 : index
    %0 = vector.load %arg1[%c0, %c0_0] : memref<8x32xf32, #tpu.memory_space<vmem>>, vector<8x32xf32>
    %1 = arith.truncf %0 : vector<8x32xf32> to vector<8x32xbf16>
    %c0_1 = arith.constant 0 : index
    %c0_2 = arith.constant 0 : index
    %2 = vector.load %arg2[%c0_1, %c0_2] : memref<32x128xbf16, #tpu.memory_space<vmem>>, vector<32x128xbf16>
    %cst = arith.constant dense<0.000000e+00> : vector<8x128xf32>
    %3 = tpu.matmul %1, %2, %cst {dimension_numbers = #tpu.dot_dimension_numbers<[1], [0], [0], [1], [0, 0, 1, 1], [], []>} : vector<8x32xbf16>, vector<32x128xbf16>, vector<8x128xf32> -> vector<8x128xf32>
    %c0_3 = arith.constant 0 : index
    %c0_4 = arith.constant 0 : index
    %4 = vector.load %arg3[%c0_3, %c0_4] : memref<1x128xf32, #tpu.memory_space<vmem>>, vector<1x128xf32>
    %5 = vector.broadcast %4 : vector<1x128xf32> to vector<8x128xf32>
    %6 = arith.addf %3, %5 : vector<8x128xf32>
    %cst_5 = arith.constant 0.000000e+00 : f32
    %7 = vector.broadcast %cst_5 : f32 to vector<8x128xf32>
    %8 = arith.maximumf %6, %7 : vector<8x128xf32>
    %9 = arith.truncf %8 : vector<8x128xf32> to vector<8x128xbf16>
    %c0_6 = arith.constant 0 : index
    %c0_7 = arith.constant 0 : index
    %10 = vector.load %arg4[%c0_6, %c0_7] : memref<128x128xbf16, #tpu.memory_space<vmem>>, vector<128x128xbf16>
    %cst_8 = arith.constant dense<0.000000e+00> : vector<8x128xf32>
    %11 = tpu.matmul %9, %10, %cst_8 {dimension_numbers = #tpu.dot_dimension_numbers<[1], [0], [0], [1], [0, 0, 1, 1], [], []>} : vector<8x128xbf16>, vector<128x128xbf16>, vector<8x128xf32> -> vector<8x128xf32>
    %c0_9 = arith.constant 0 : index
    %c0_10 = arith.constant 0 : index
    %12 = vector.load %arg5[%c0_9, %c0_10] : memref<1x128xf32, #tpu.memory_space<vmem>>, vector<1x128xf32>
    %13 = vector.broadcast %12 : vector<1x128xf32> to vector<8x128xf32>
    %14 = arith.addf %11, %13 : vector<8x128xf32>
    %cst_11 = arith.constant 0.000000e+00 : f32
    %15 = vector.broadcast %cst_11 : f32 to vector<8x128xf32>
    %16 = arith.maximumf %14, %15 : vector<8x128xf32>
    %17 = arith.truncf %16 : vector<8x128xf32> to vector<8x128xbf16>
    %c0_12 = arith.constant 0 : index
    %c0_13 = arith.constant 0 : index
    %18 = vector.load %arg6[%c0_12, %c0_13] : memref<128x128xbf16, #tpu.memory_space<vmem>>, vector<128x128xbf16>
    %cst_14 = arith.constant dense<0.000000e+00> : vector<8x128xf32>
    %19 = tpu.matmul %17, %18, %cst_14 {dimension_numbers = #tpu.dot_dimension_numbers<[1], [0], [0], [1], [0, 0, 1, 1], [], []>} : vector<8x128xbf16>, vector<128x128xbf16>, vector<8x128xf32> -> vector<8x128xf32>
    %c0_15 = arith.constant 0 : index
    %c0_16 = arith.constant 0 : index
    %20 = vector.load %arg7[%c0_15, %c0_16] : memref<1x128xf32, #tpu.memory_space<vmem>>, vector<1x128xf32>
    %21 = vector.broadcast %20 : vector<1x128xf32> to vector<8x128xf32>
    %22 = arith.addf %19, %21 : vector<8x128xf32>
    %c0_17 = arith.constant 0 : index
    %c0_18 = arith.constant 0 : index
    %23 = vector.load %arg8[%c0_17, %c0_18] : memref<8x128xf32, #tpu.memory_space<vmem>>, vector<8x128xf32>
    tpu.vector_store %arg8[%c0_17, %c0_18], %22 {strides = array<i32>} : memref<8x128xf32, #tpu.memory_space<vmem>>, vector<8x128xf32>,
    return
  }
  func.func @transform_0(%arg0: i32) -> (i32, i32) {
    %c0_i32 = arith.constant 0 : i32
    %c0_i32_0 = arith.constant 0 : i32
    return %arg0, %c0_i32 : i32, i32
  }
  func.func @transform_1(%arg0: i32) -> (i32, i32) {
    %c0_i32 = arith.constant 0 : i32
    %c0_i32_0 = arith.constant 0 : i32
    %c0_i32_1 = arith.constant 0 : i32
    return %c0_i32, %c0_i32_0 : i32, i32
  }
  func.func @transform_2(%arg0: i32) -> (i32, i32) {
    %c0_i32 = arith.constant 0 : i32
    %c0_i32_0 = arith.constant 0 : i32
    %c0_i32_1 = arith.constant 0 : i32
    return %c0_i32, %c0_i32_0 : i32, i32
  }
  func.func @transform_3(%arg0: i32) -> (i32, i32) {
    %c0_i32 = arith.constant 0 : i32
    %c0_i32_0 = arith.constant 0 : i32
    %c0_i32_1 = arith.constant 0 : i32
    return %c0_i32, %c0_i32_0 : i32, i32
  }
  func.func @transform_4(%arg0: i32) -> (i32, i32) {
    %c0_i32 = arith.constant 0 : i32
    %c0_i32_0 = arith.constant 0 : i32
    %c0_i32_1 = arith.constant 0 : i32
    return %c0_i32, %c0_i32_0 : i32, i32
  }
  func.func @transform_5(%arg0: i32) -> (i32, i32) {
    %c0_i32 = arith.constant 0 : i32
    %c0_i32_0 = arith.constant 0 : i32
    %c0_i32_1 = arith.constant 0 : i32
    return %c0_i32, %c0_i32_0 : i32, i32
  }
  func.func @transform_6(%arg0: i32) -> (i32, i32) {
    %c0_i32 = arith.constant 0 : i32
    %c0_i32_0 = arith.constant 0 : i32
    %c0_i32_1 = arith.constant 0 : i32
    return %c0_i32, %c0_i32_0 : i32, i32
  }
  func.func @transform_7(%arg0: i32) -> (i32, i32) {
    %c0_i32 = arith.constant 0 : i32
    %c0_i32_0 = arith.constant 0 : i32
    return %arg0, %c0_i32 : i32, i32
  }
}

</mosaic_0001>

<llo_original>
// kernel: tpu_custom_call.1
$region0: #{tpu_custom_call.1}
  #allocation0 [shape = 'u32[]', space=smem, size = 0x4, offset = 0x4, fixed_abs, tag = 'smem constant byte address 0x4 - core index']
  #allocation1 [shape = 'u32[72,128]{1,0:T(1,128)}', space=vmem, size = 0x9000, scoped, tag = 'internal scratch']
  %s0 = inlined_call_operand.hbm [shape: f32[8,32], index: 0, kind: input, shape index: {}]
  %s1 = inlined_call_operand.hbm [shape: bf16[32,128], index: 1, kind: input, shape index: {}]
  %s2 = inlined_call_operand.vmem [shape: f32[1,128], index: 2, kind: input, shape index: {}]
  %s3 = inlined_call_operand.hbm [shape: bf16[128,128], index: 3, kind: input, shape index: {}]
  %s4 = inlined_call_operand.vmem [shape: f32[1,128], index: 4, kind: input, shape index: {}]
  %s5 = inlined_call_operand.hbm [shape: bf16[128,128], index: 5, kind: input, shape index: {}]
  %s6 = inlined_call_operand.vmem [shape: f32[1,128], index: 6, kind: input, shape index: {}]
  %s7 = inlined_call_operand.hbm [shape: f32[8,128], index: 7, kind: output, shape index: {}]
  %s8 = sld [smem:[#allocation0]]
  $region54: #{tpu_custom_call.1} parent=0
    _
  %s10 = ssub.s32 1, %s8
  %s11 = scalar_select 0, %s10, %s8
  $region1: #{tpu_custom_call.1} parent=0
    #allocation2 [shape = 'u8[4096]{0}', space=vmem, size = 0x1000, scoped, tag = 'input window, operand 0, single buffered']
    #allocation3 [shape = 's32[1]{0}', space=sflag, size = 0x4, scoped, tag = 'scoped memory for tpu_custom_call.1']
    #allocation4 [shape = 's32[1]{0}', space=sflag, size = 0x4, scoped, tag = 'scoped memory for tpu_custom_call.1']
    #allocation5 [shape = 'u8[8192]{0}', space=vmem, size = 0x2000, scoped, tag = 'input window, operand 1, single buffered']
    #allocation6 [shape = 's32[1]{0}', space=sflag, size = 0x4, scoped, tag = 'scoped memory for tpu_custom_call.1']
    #allocation7 [shape = 'u8[32768]{0}', space=vmem, size = 0x8000, scoped, tag = 'input window, operand 3, single buffered']
    #allocation8 [shape = 'u8[32768]{0}', space=vmem, size = 0x8000, scoped, tag = 'input window, operand 5, single buffered']
    #allocation9 [shape = 's32[1]{0}', space=sflag, size = 0x4, scoped, tag = 'scoped memory for tpu_custom_call.1']
    #allocation10 [shape = 'u8[4096]{0}', space=vmem, size = 0x1000, scoped, tag = 'output window, operand 0, single buffered']
    %12 = vsyncpa [#allocation3], 0
    %13 = vsyncpa [#allocation6], 0
    %14 = vsyncpa [#allocation9], 0
    %15 = vsyncpa [#allocation4], 0
    // Predicated region
    $region2: #{tpu_custom_call.1} parent=1 // pred_check
      _
    $region3: #{tpu_custom_call.1} parent=1 // pred_check_branch
      %17 = sbr.rel (0) target = $region5
    $region4: #{tpu_custom_call.1} parent=1 // pred_region
      %19 = vsyncadd [#allocation3], 0
      %s21 = sshll.u32 %s0, 4
      %s22 = int_to_ptr.hbm [resolvable:$true] %s21
      %s23 = sshll.u32 [#allocation2], 4
      %s24 = int_to_ptr.vmem [resolvable:$true] %s23
      %26 = dma.hbm_to_vmem [thread:$0]  %s22, 128, %s24, [#allocation3]
    $region5: #{tpu_custom_call.1} parent=1 // pred_fallthru
      _
    // Predicated region
    $region6: #{tpu_custom_call.1} parent=1 // pred_check
      _
    $region7: #{tpu_custom_call.1} parent=1 // pred_check_branch
      %28 = sbr.rel (0) target = $region9
    $region8: #{tpu_custom_call.1} parent=1 // pred_region
      %30 = vsyncadd [#allocation6], 0
      %s31 = sshll.u32 %s1, 4
      %s32 = int_to_ptr.hbm [resolvable:$true] %s31
      %s33 = sshll.u32 [#allocation5], 4
      %s34 = int_to_ptr.vmem [resolvable:$true] %s33
      %39 = dma.hbm_to_vmem [thread:$0]  %s32, 256, %s34, [#allocation6], 64, 64, 4
    $region9: #{tpu_custom_call.1} parent=1 // pred_fallthru
      _
    // Predicated region
    $region10: #{tpu_custom_call.1} parent=1 // pred_check
      _
    $region11: #{tpu_custom_call.1} parent=1 // pred_check_branch
      %41 = sbr.rel (0) target = $region13
    $region12: #{tpu_custom_call.1} parent=1 // pred_region
      _
    $region13: #{tpu_custom_call.1} parent=1 // pred_fallthru
      _
    // Predicated region
    $region14: #{tpu_custom_call.1} parent=1 // pred_check
      _
    $region15: #{tpu_custom_call.1} parent=1 // pred_check_branch
      %43 = sbr.rel (0) target = $region17
    $region16: #{tpu_custom_call.1} parent=1 // pred_region
      %45 = vsyncadd [#allocation6], 0
      %s46 = sshll.u32 %s3, 4
      %s47 = int_to_ptr.hbm [resolvable:$true] %s46
      %s48 = sshll.u32 [#allocation7], 4
      %s49 = int_to_ptr.vmem [resolvable:$true] %s48
      %54 = dma.hbm_to_vmem [thread:$0]  %s47, 1024, %s49, [#allocation6], 64, 64, 4
    $region17: #{tpu_custom_call.1} parent=1 // pred_fallthru
      _
    // Predicated region
    $region18: #{tpu_custom_call.1} parent=1 // pred_check
      _
    $region19: #{tpu_custom_call.1} parent=1 // pred_check_branch
      %56 = sbr.rel (0) target = $region21
    $region20: #{tpu_custom_call.1} parent=1 // pred_region
      _
    $region21: #{tpu_custom_call.1} parent=1 // pred_fallthru
      _
    // Predicated region
    $region22: #{tpu_custom_call.1} parent=1 // pred_check
      _
    $region23: #{tpu_custom_call.1} parent=1 // pred_check_branch
      %58 = sbr.rel (0) target = $region25
    $region24: #{tpu_custom_call.1} parent=1 // pred_region
      %60 = vsyncadd [#allocation9], 0
      %s61 = sshll.u32 %s5, 4
      %s62 = int_to_ptr.hbm [resolvable:$true] %s61
      %s63 = sshll.u32 [#allocation8], 4
      %s64 = int_to_ptr.vmem [resolvable:$true] %s63
      %69 = dma.hbm_to_vmem [thread:$0]  %s62, 1024, %s64, [#allocation9], 64, 64, 4
    $region25: #{tpu_custom_call.1} parent=1 // pred_fallthru
      _
    // Predicated region
    $region26: #{tpu_custom_call.1} parent=1 // pred_check
      _
    $region27: #{tpu_custom_call.1} parent=1 // pred_check_branch
      %71 = sbr.rel (0) target = $region29
    $region28: #{tpu_custom_call.1} parent=1 // pred_region
      _
    $region29: #{tpu_custom_call.1} parent=1 // pred_fallthru
      _
    // Predicated region
    $region30: #{tpu_custom_call.1} parent=1 // pred_check
      _
    $region31: #{tpu_custom_call.1} parent=1 // pred_check_branch
      %73 = sbr.rel (0) target = $region33
    $region32: #{tpu_custom_call.1} parent=1 // pred_region
      %75 = dma.done [#allocation3], 128
    $region33: #{tpu_custom_call.1} parent=1 // pred_fallthru
      _
    // Predicated region
    $region34: #{tpu_custom_call.1} parent=1 // pred_check
      _
    $region35: #{tpu_custom_call.1} parent=1 // pred_check_branch
      %77 = sbr.rel (0) target = $region37
    $region36: #{tpu_custom_call.1} parent=1 // pred_region
      %79 = dma.done [#allocation6], 256
    $region37: #{tpu_custom_call.1} parent=1 // pred_fallthru
      _
    // Predicated region
    $region38: #{tpu_custom_call.1} parent=1 // pred_check
      _
    $region39: #{tpu_custom_call.1} parent=1 // pred_check_branch
      %81 = sbr.rel (0) target = $region41
    $region40: #{tpu_custom_call.1} parent=1 // pred_region
      %83 = dma.done [#allocation6], 1024
    $region41: #{tpu_custom_call.1} parent=1 // pred_fallthru
      _
    // Predicated region
    $region42: #{tpu_custom_call.1} parent=1 // pred_check
      _
    $region43: #{tpu_custom_call.1} parent=1 // pred_check_branch
      %85 = sbr.rel (0) target = $region45
    $region44: #{tpu_custom_call.1} parent=1 // pred_region
      %87 = dma.done [#allocation9], 1024
    $region45: #{tpu_custom_call.1} parent=1 // pred_fallthru
      _
    %v89 = vld [vmem:[#allocation2] sm:$0xff]
    %v90 = vpack.c.bf16 %v89, %v89
    %v91 = vld [vmem:[#allocation5] sm:$0xf]
    %v92 = vld [vmem:[#allocation5 + $0x4] sm:$0xf]
    %v93 = vld [vmem:[#allocation5 + $0x8] sm:$0xf]
    %v94 = vld [vmem:[#allocation5 + $0xc] sm:$0xf]
    %v95 = vld [vmem:[%s2] sm:$0x1]
    %v97 = vperm.slane %v95, 0
    %v103 = vunpack.c.l.b16 %v91
    %v104 = vunpack.c.l.b16 %v92
    %v105 = vunpack.c.l.b16 %v93
    %v106 = vunpack.c.l.b16 %v94
    %v107 = vpack.c.b16 %v104, %v103
    %v108 = vpack.c.b16 %v106, %v105
    %vm111 = vcmask 261120
    %v113 = vsel %vm111, %v90, 0
    %115 = vmatpush.bf16.msra.mxu0 0
    %116 = vmatpush.bf16.msra.mxu0 0
    %117 = vmatpush.bf16.msra.mxu0 0
    %118 = vmatpush.bf16.msra.mxu0 0
    %119 = vmatpush.bf16.msra.mxu0 0
    %120 = vmatpush.bf16.msra.mxu0 0
    %121 = vmatpush.bf16.msra.mxu0 %v108
    %122 = vmatpush.bf16.msra.mxu0 %v107
    %123 = vmatmul.bf16.gmra.mxu0 %v113
    %v124 = vpop.f32.mrf.mxu0
    %v125 = vadd.f32 %v97, %v124
    %v126 = vpop.f32.mrf.mxu0
    %127 = vdwg.mxu0
    %v128 = vmax.f32 %v125, 0.0
    %v129 = vpack.c.bf16 %v128, %v128
    %v130 = vld [vmem:[#allocation7] sm:$0xf]
    %v131 = vld [vmem:[#allocation7 + $0x4] sm:$0xf]
    %v132 = vld [vmem:[#allocation7 + $0x8] sm:$0xf]
    %v133 = vld [vmem:[#allocation7 + $0xc] sm:$0xf]
    %v134 = vld [vmem:[#allocation7 + $0x10] sm:$0xf]
    %v135 = vld [vmem:[#allocation7 + $0x14] sm:$0xf]
    %v136 = vld [vmem:[#allocation7 + $0x18] sm:$0xf]
    %v137 = vld [vmem:[#allocation7 + $0x1c] sm:$0xf]
    %v138 = vld [vmem:[#allocation7 + $0x20] sm:$0xf]
    %v139 = vld [vmem:[#allocation7 + $0x24] sm:$0xf]
    %v140 = vld [vmem:[#allocation7 + $0x28] sm:$0xf]
    %v141 = vld [vmem:[#allocation7 + $0x2c] sm:$0xf]
    %v142 = vld [vmem:[#allocation7 + $0x30] sm:$0xf]
    %v143 = vld [vmem:[#allocation7 + $0x34] sm:$0xf]
    %v144 = vld [vmem:[#allocation7 + $0x38] sm:$0xf]
    %v145 = vld [vmem:[#allocation7 + $0x3c] sm:$0xf]
    %v146 = vld [vmem:[%s4] sm:$0x1]
    %v148 = vperm.slane %v146, 0
    %v166 = vunpack.c.l.b16 %v130
    %v167 = vunpack.c.l.b16 %v131
    %v168 = vunpack.c.l.b16 %v132
    %v169 = vunpack.c.l.b16 %v133
    %v170 = vunpack.c.l.b16 %v134
    %v171 = vunpack.c.l.b16 %v135
    %v172 = vunpack.c.l.b16 %v136
    %v173 = vunpack.c.l.b16 %v137
    %v174 = vunpack.c.l.b16 %v138
    %v175 = vunpack.c.l.b16 %v139
    %v176 = vunpack.c.l.b16 %v140
    %v177 = vunpack.c.l.b16 %v141
    %v178 = vunpack.c.l.b16 %v142
    %v179 = vunpack.c.l.b16 %v143
    %v180 = vunpack.c.l.b16 %v144
    %v181 = vunpack.c.l.b16 %v145
    %v182 = vpack.c.b16 %v167, %v166
    %v183 = vpack.c.b16 %v169, %v168
    %v184 = vpack.c.b16 %v171, %v170
    %v185 = vpack.c.b16 %v173, %v172
    %v186 = vpack.c.b16 %v175, %v174
    %v187 = vpack.c.b16 %v177, %v176
    %v188 = vpack.c.b16 %v179, %v178
    %v189 = vpack.c.b16 %v181, %v180
    %198 = vmatpush.bf16.msra.mxu0 %v189
    %199 = vmatpush.bf16.msra.mxu0 %v188
    %200 = vmatpush.bf16.msra.mxu0 %v187
    %201 = vmatpush.bf16.msra.mxu0 %v186
    %202 = vmatpush.bf16.msra.mxu0 %v185
    %203 = vmatpush.bf16.msra.mxu0 %v184
    %204 = vmatpush.bf16.msra.mxu0 %v183
    %205 = vmatpush.bf16.msra.mxu0 %v182
    %206 = vmatmul.bf16.gmra.mxu0 %v129
    %v207 = vpop.f32.mrf.mxu0
    %v208 = vadd.f32 %v148, %v207
    %v209 = vpop.f32.mrf.mxu0
    %210 = vdwg.mxu0
    %v211 = vmax.f32 %v208, 0.0
    %v212 = vpack.c.bf16 %v211, %v211
    %v213 = vld [vmem:[#allocation8] sm:$0xf]
    %v214 = vld [vmem:[#allocation8 + $0x4] sm:$0xf]
    %v215 = vld [vmem:[#allocation8 + $0x8] sm:$0xf]
    %v216 = vld [vmem:[#allocation8 + $0xc] sm:$0xf]
    %v217 = vld [vmem:[#allocation8 + $0x10] sm:$0xf]
    %v218 = vld [vmem:[#allocation8 + $0x14] sm:$0xf]
    %v219 = vld [vmem:[#allocation8 + $0x18] sm:$0xf]
    %v220 = vld [vmem:[#allocation8 + $0x1c] sm:$0xf]
    %v221 = vld [vmem:[#allocation8 + $0x20] sm:$0xf]
    %v222 = vld [vmem:[#allocation8 + $0x24] sm:$0xf]
    %v223 = vld [vmem:[#allocation8 + $0x28] sm:$0xf]
    %v224 = vld [vmem:[#allocation8 + $0x2c] sm:$0xf]
    %v225 = vld [vmem:[#allocation8 + $0x30] sm:$0xf]
    %v226 = vld [vmem:[#allocation8 + $0x34] sm:$0xf]
    %v227 = vld [vmem:[#allocation8 + $0x38] sm:$0xf]
    %v228 = vld [vmem:[#allocation8 + $0x3c] sm:$0xf]
    %v229 = vld [vmem:[%s6] sm:$0x1]
    %v231 = vperm.slane %v229, 0
    %v249 = vunpack.c.l.b16 %v213
    %v250 = vunpack.c.l.b16 %v214
    %v251 = vunpack.c.l.b16 %v215
    %v252 = vunpack.c.l.b16 %v216
    %v253 = vunpack.c.l.b16 %v217
    %v254 = vunpack.c.l.b16 %v218
    %v255 = vunpack.c.l.b16 %v219
    %v256 = vunpack.c.l.b16 %v220
    %v257 = vunpack.c.l.b16 %v221
    %v258 = vunpack.c.l.b16 %v222
    %v259 = vunpack.c.l.b16 %v223
    %v260 = vunpack.c.l.b16 %v224
    %v261 = vunpack.c.l.b16 %v225
    %v262 = vunpack.c.l.b16 %v226
    %v263 = vunpack.c.l.b16 %v227
    %v264 = vunpack.c.l.b16 %v228
    %v265 = vpack.c.b16 %v250, %v249
    %v266 = vpack.c.b16 %v252, %v251
    %v267 = vpack.c.b16 %v254, %v253
    %v268 = vpack.c.b16 %v256, %v255
    %v269 = vpack.c.b16 %v258, %v257
    %v270 = vpack.c.b16 %v260, %v259
    %v271 = vpack.c.b16 %v262, %v261
    %v272 = vpack.c.b16 %v264, %v263
    %281 = vmatpush.bf16.msra.mxu0 %v272
    %282 = vmatpush.bf16.msra.mxu0 %v271
    %283 = vmatpush.bf16.msra.mxu0 %v270
    %284 = vmatpush.bf16.msra.mxu0 %v269
    %285 = vmatpush.bf16.msra.mxu0 %v268
    %286 = vmatpush.bf16.msra.mxu0 %v267
    %287 = vmatpush.bf16.msra.mxu0 %v266
    %288 = vmatpush.bf16.msra.mxu0 %v265
    %289 = vmatmul.bf16.gmra.mxu0 %v212
    %v290 = vpop.f32.mrf.mxu0
    %v291 = vadd.f32 %v231, %v290
    %v292 = vpop.f32.mrf.mxu0
    %293 = vdwg.mxu0
    %294 = vst [vmem:[#allocation10] sm:$0xff] %v291
    // Predicated region
    $region46: #{tpu_custom_call.1} parent=1 // pred_check
      _
    $region47: #{tpu_custom_call.1} parent=1 // pred_check_branch
      %296 = sbr.rel (0) target = $region49
    $region48: #{tpu_custom_call.1} parent=1 // pred_region
      %298 = vsyncadd [#allocation4], 0
      %s300 = sshll.u32 [#allocation10], 4
      %s301 = int_to_ptr.vmem [resolvable:$true] %s300
      %s302 = sshll.u32 %s7, 4
      %s303 = int_to_ptr.hbm [resolvable:$true] %s302
      %305 = dma.vmem_to_hbm [thread:$0]  %s301, 128, %s303, [#allocation4]
    $region49: #{tpu_custom_call.1} parent=1 // pred_fallthru
      _
    // Predicated region
    $region50: #{tpu_custom_call.1} parent=1 // pred_check
      _
    $region51: #{tpu_custom_call.1} parent=1 // pred_check_branch
      %307 = sbr.rel (0) target = $region53
    $region52: #{tpu_custom_call.1} parent=1 // pred_region
      %309 = dma.done [#allocation4], 128
    $region53: #{tpu_custom_call.1} parent=1 // pred_fallthru
      _
    %310 = vsyncpa [#allocation3], 1
    %311 = vsyncpa [#allocation6], 1
    %312 = vsyncpa [#allocation9], 1
    %313 = vsyncpa [#allocation4], 1

</llo_original>
